<compile_context>
chip_gen: v7x
topology: tpu7x:2x2x1
jax: 0.10.0
libtpu: 0.0.40
codegen_flags: <defaults>
</compile_context>

<pallas_src>
import functools

import jax
import jax.numpy as jnp
from jax.experimental import pallas as pl
from jax.experimental.pallas import tpu as pltpu


def _cdiv(a, b):
    return -(-a // b)


def _round_up(x, m):
    return _cdiv(x, m) * m


# -----------------------------------------------------------------------------
# Pallas kernel: fused matmul (im2col conv, BN scale pre-folded) + bias + ReLU
# -----------------------------------------------------------------------------
def _stem_kernel(p_ref, w_ref, bias_ref, o_ref):
    # p_ref:    (TM, 2K)  bf16  -- two packed output pixels per row
    # w_ref:    (2K, 128) bf16  -- block-diag [[W*scale, 0], [0, W*scale]]
    # bias_ref: (1, 128)  f32   -- folded BN bias, tiled x2
    # o_ref:    (TM, 128) bf16  -- lane-dense output (2 pixels per row)
    acc = jnp.dot(p_ref[...], w_ref[...], preferred_element_type=jnp.float32)
    o_ref[...] = jnp.maximum(acc + bias_ref[...], 0.0).astype(o_ref.dtype)


def stem_conv_bn_relu(patches2, w2, bias2, *, tm):
    """patches2: [M2p, 2K] bf16, w2: [2K, 128] bf16, bias2: [1, 128] f32.

    Returns [M2p, 128] bf16 = relu(patches2 @ w2 + bias2), f32 accumulation.
    M2p is an exact multiple of tm (padding folded into the producer chain).
    """
    M2p, K2 = patches2.shape
    C2 = w2.shape[1]                     # 128 = 2 * C_out -> lane-dense stores
    assert M2p % tm == 0 and tm % 8 == 0

    return pl.pallas_call(
        _stem_kernel,
        out_shape=jax.ShapeDtypeStruct((M2p, C2), jnp.bfloat16),
        grid=(M2p // tm,),
        in_specs=[
            pl.BlockSpec((tm, K2), lambda i: (i, 0)),
            pl.BlockSpec((K2, C2), lambda i: (0, 0)),   # weights resident
            pl.BlockSpec((1, C2), lambda i: (0, 0)),    # bias resident
        ],
        out_specs=pl.BlockSpec((tm, C2), lambda i: (i, 0)),
        compiler_params=pltpu.CompilerParams(
            dimension_semantics=("parallel",),               # megacore on v7x
            allow_input_fusion=[True, False, False],         # fuse im2col producer
        ),
    )(patches2, w2, bias2)


# -----------------------------------------------------------------------------
# Glue: im2col patch extraction (single fused producer chain), param folding
# -----------------------------------------------------------------------------
def _im2col_7x7_s2_p3(x_nchw, m_pad):
    """NCHW image -> [m_pad, KH*KW*C_in] bf16 patches (M rows valid, rest zero).

    stack/transpose/reshape/pad form one copy-fusion chain, so the pad does NOT
    add an extra HBM round-trip of the slab (review item: no whole-slab jnp.pad
    as a separate consumer).
    """
    x = jnp.transpose(x_nchw, (0, 2, 3, 1)).astype(jnp.bfloat16)   # NHWC, bf16
    N, H, W, C = x.shape
    KH = KW = 7
    stride, pad = 2, 3
    H_out = (H + 2 * pad - KH) // stride + 1
    W_out = (W + 2 * pad - KW) // stride + 1
    xp = jnp.pad(x, ((0, 0), (pad, pad), (pad, pad), (0, 0)))

    taps = []
    for kh in range(KH):
        for kw in range(KW):
            taps.append(
                xp[:, kh : kh + stride * (H_out - 1) + 1 : stride,
                      kw : kw + stride * (W_out - 1) + 1 : stride, :]
            )
    # [KH*KW, N, H_out, W_out, C] -> [N, H_out, W_out, KH*KW, C]
    p = jnp.stack(taps, axis=0).transpose(1, 2, 3, 0, 4)
    M = N * H_out * W_out
    patches = p.reshape(M, KH * KW * C)
    if m_pad > M:
        patches = jnp.pad(patches, ((0, m_pad - M), (0, 0)))
    return patches, (N, H_out, W_out)


def resnet34_stem_forward(image_nchw, params, *, out_layout="NHWC", tm=2048):
    """Fused conv7x7(s=2,p=3) + BN(eval) + ReLU via the Pallas kernel.

    Returns bf16 NHWC by default (downstream ResNet layers consume bf16 and the
    extra NCHW transpose round-trip is avoided); pass out_layout="NCHW" for the
    PyTorch layout.
    """
    w = params["conv1_w"]                          # [64, 3, 7, 7]
    C_out = w.shape[0]
    N, _, H, W = image_nchw.shape
    H_out = (H + 2 * 3 - 7) // 2 + 1
    W_out = (W + 2 * 3 - 7) // 2 + 1
    M = N * H_out * W_out                          # output pixels
    M2 = _cdiv(M, 2)                               # packed rows (2 pixels/row)

    # Tile size: as large as possible for HBM-BW utilization, but keep >=4 grid
    # steps when there is enough work (v7x: 2 TensorCores) and 8-row alignment.
    # Per-step VMEM @ tm=2048: in 2*1.2MiB + out 2*0.5MiB + weights ~0.08MiB
    # ~= 3.6 MiB << 32 MiB scoped default on all generations (v7x-safe).
    tm = max(8, min(tm, _round_up(_cdiv(M2, 4), 8)))
    M2p = _round_up(M2, tm)

    # Fold BatchNorm (eval) into per-channel scale/bias; fold scale into weights.
    eps = 1e-5
    inv_std = jax.lax.rsqrt(params["bn1_var"] + eps)
    scale = params["bn1_gamma"] * inv_std
    bias = params["bn1_beta"] - params["bn1_mean"] * scale

    # [C_out, C_in, KH, KW] -> [KH, KW, C_in, C_out] -> [147, C_out], scaled.
    w_flat = jnp.transpose(w, (2, 3, 1, 0)).reshape(-1, C_out) * scale[None, :]
    K = w_flat.shape[0]
    w_bf16 = w_flat.astype(jnp.bfloat16)
    zeros = jnp.zeros_like(w_bf16)
    # Block-diagonal weight: out_row = [patch_even @ Ws, patch_odd @ Ws].
    w2 = jnp.concatenate(
        [jnp.concatenate([w_bf16, zeros], axis=1),
         jnp.concatenate([zeros, w_bf16], axis=1)], axis=0)        # (2K, 128)
    bias2 = jnp.tile(bias, 2).reshape(1, 2 * C_out).astype(jnp.float32)

    # Patches at the exact padded row count -> grid divides evenly, single slab
    # materialization (or fused into the pallas_call via allow_input_fusion).
    patches, _ = _im2col_7x7_s2_p3(image_nchw, 2 * M2p)
    patches2 = patches.reshape(M2p, 2 * K)                         # free reshape

    out2 = stem_conv_bn_relu(patches2, w2, bias2, tm=tm)           # (M2p, 128) bf16
    out = out2.reshape(2 * M2p, C_out)[:M]                         # drop pad rows
    out_nhwc = out.reshape(N, H_out, W_out, C_out)
    if out_layout == "NHWC":
        return out_nhwc
    return jnp.transpose(out_nhwc, (0, 3, 1, 2))                   # optional NCHW


def init_params(key):
    k1, k2, k3, k4, k5 = jax.random.split(key, 5)
    return {
        "conv1_w": jax.random.normal(k1, (64, 3, 7, 7), jnp.float32) * 0.05,
        "bn1_gamma": jax.random.uniform(k2, (64,), jnp.float32, 0.5, 1.5),
        "bn1_beta": jax.random.normal(k3, (64,), jnp.float32) * 0.1,
        "bn1_mean": jax.random.normal(k4, (64,), jnp.float32) * 0.1,
        "bn1_var": jax.random.uniform(k5, (64,), jnp.float32, 0.5, 1.5),
    }


# -----------------------------------------------------------------------------
# The Classifier module, mirrored exactly
# -----------------------------------------------------------------------------
class Classifier:
    def __init__(self, backbone: str = "res18"):
        # Backbone (resnet34) parameters: only the stem is materialized here,
        # since the reference forward never invokes the backbone.
        self.params = init_params(jax.random.PRNGKey(0))

    def forward(self, image, mask):
        # TODO(synk): reference forward body is `pass` — it returns None and
        # never uses `image`, `mask`, or the backbone; reproduced exactly.
        return None


if __name__ == "__main__":
    key = jax.random.PRNGKey(0)
    k_img, k_msk = jax.random.split(key)
    # Small shapes consistent with an RGB image + mask input (NCHW).
    image = jax.random.normal(k_img, (2, 3, 16, 16), jnp.float32)
    mask = (jax.random.uniform(k_msk, (2, 1, 16, 16)) > 0.5).astype(jnp.float32)

    clf = Classifier()

    # 1) Exact forward semantics of the reference module.
    assert clf.forward(image, mask) is None

    # 2) Representative Pallas hot path: resnet34 stem on `image`.
    fwd = jax.jit(functools.partial(resnet34_stem_forward, params=clf.params))
    out = jax.block_until_ready(fwd(image))
    assert out.shape == (2, 8, 8, 64)
    assert out.dtype == jnp.bfloat16

    # Cross-check against a full-precision f32 reference (conv + BN + ReLU).
    # Tolerance covers bf16 operand quantization, bf16 scale folding, and the
    # final bf16 store (per review: compare against the real f32 math, not an
    # identically-quantized reference).
    ref = jax.lax.conv_general_dilated(
        image, clf.params["conv1_w"], window_strides=(2, 2),
        padding=((3, 3), (3, 3)),
        dimension_numbers=("NCHW", "OIHW", "NCHW"))
    inv_std = jax.lax.rsqrt(clf.params["bn1_var"] + 1e-5)
    scale = clf.params["bn1_gamma"] * inv_std
    bias = clf.params["bn1_beta"] - clf.params["bn1_mean"] * scale
    ref = jnp.maximum(ref * scale[None, :, None, None]
                      + bias[None, :, None, None], 0.0)
    ref_nhwc = jnp.transpose(ref, (0, 2, 3, 1))
    assert jnp.allclose(out.astype(jnp.float32), ref_nhwc, atol=4e-2, rtol=4e-2)

    print("KERNEL_OK")
</pallas_src>

<mosaic_0001>
module attributes {stable_mosaic.version = 11 : i64} {
  func.func @_stem_kernel(%arg0: i32, %arg1: memref<16x294xbf16, #tpu.memory_space<vmem>>, %arg2: memref<294x128xbf16, #tpu.memory_space<vmem>>, %arg3: memref<1x128xf32, #tpu.memory_space<vmem>>, %arg4: memref<16x128xbf16, #tpu.memory_space<vmem>>) attributes {dimension_semantics = [#tpu.dimension_semantics<parallel>], iteration_bounds = array<i64: 4>, scalar_prefetch = 0 : i64, scratch_operands = 0 : i64, tpu.core_type = #tpu.core_type<tc>, window_params = [{transform_indices = @transform_0, window_bounds = array<i64: 16, 294>}, {pipeline_mode = #tpu.pipeline_mode<synchronous>, transform_indices = @transform_1, window_bounds = array<i64: 294, 128>}, {pipeline_mode = #tpu.pipeline_mode<synchronous>, transform_indices = @transform_2, window_bounds = array<i64: 1, 128>}, {transform_indices = @transform_3, window_bounds = array<i64: 16, 128>}]} {
    %c0 = arith.constant 0 : index
    %c0_0 = arith.constant 0 : index
    %0 = vector.load %arg1[%c0, %c0_0] : memref<16x294xbf16, #tpu.memory_space<vmem>>, vector<16x294xbf16>
    %c0_1 = arith.constant 0 : index
    %c0_2 = arith.constant 0 : index
    %1 = vector.load %arg2[%c0_1, %c0_2] : memref<294x128xbf16, #tpu.memory_space<vmem>>, vector<294x128xbf16>
    %cst = arith.constant dense<0.000000e+00> : vector<16x128xf32>
    %2 = tpu.matmul %0, %1, %cst {dimension_numbers = #tpu.dot_dimension_numbers<[1], [0], [0], [1], [0, 0, 1, 1], [], []>} : vector<16x294xbf16>, vector<294x128xbf16>, vector<16x128xf32> -> vector<16x128xf32>
    %c0_3 = arith.constant 0 : index
    %c0_4 = arith.constant 0 : index
    %3 = vector.load %arg3[%c0_3, %c0_4] : memref<1x128xf32, #tpu.memory_space<vmem>>, vector<1x128xf32>
    %4 = vector.broadcast %3 : vector<1x128xf32> to vector<16x128xf32>
    %5 = arith.addf %2, %4 : vector<16x128xf32>
    %cst_5 = arith.constant 0.000000e+00 : f32
    %6 = vector.broadcast %cst_5 : f32 to vector<16x128xf32>
    %7 = arith.maximumf %5, %6 : vector<16x128xf32>
    %8 = arith.truncf %7 : vector<16x128xf32> to vector<16x128xbf16>
    %c0_6 = arith.constant 0 : index
    %c0_7 = arith.constant 0 : index
    %9 = vector.load %arg4[%c0_6, %c0_7] : memref<16x128xbf16, #tpu.memory_space<vmem>>, vector<16x128xbf16>
    tpu.vector_store %arg4[%c0_6, %c0_7], %8 {strides = array<i32>} : memref<16x128xbf16, #tpu.memory_space<vmem>>, vector<16x128xbf16>,
    return
  }
  func.func @transform_0(%arg0: i32) -> (i32, i32) {
    %c0_i32 = arith.constant 0 : i32
    %c0_i32_0 = arith.constant 0 : i32
    return %arg0, %c0_i32 : i32, i32
  }
  func.func @transform_1(%arg0: i32) -> (i32, i32) {
    %c0_i32 = arith.constant 0 : i32
    %c0_i32_0 = arith.constant 0 : i32
    %c0_i32_1 = arith.constant 0 : i32
    return %c0_i32, %c0_i32_0 : i32, i32
  }
  func.func @transform_2(%arg0: i32) -> (i32, i32) {
    %c0_i32 = arith.constant 0 : i32
    %c0_i32_0 = arith.constant 0 : i32
    %c0_i32_1 = arith.constant 0 : i32
    return %c0_i32, %c0_i32_0 : i32, i32
  }
  func.func @transform_3(%arg0: i32) -> (i32, i32) {
    %c0_i32 = arith.constant 0 : i32
    %c0_i32_0 = arith.constant 0 : i32
    return %arg0, %c0_i32 : i32, i32
  }
}

</mosaic_0001>

<llo_original>
// kernel: tile.6
$region0: #{tile.6}
  #allocation0 [shape = 's32[1]{0}', space=sflag, size = 0x4, scoped, tag = 'scoped memory for tile.6']
  %s0 = inlined_call_operand.vmem [shape: f32[64], index: 0, kind: input, shape index: {}]
  %s1 = inlined_call_operand.vmem [shape: f32[2,64], index: 1, kind: output, shape index: {}]
  // Predicated region
  $region2: #{tile.6} parent=0 // pred_check
    _
  $region3: #{tile.6} parent=0 // pred_check_branch
    %3 = sbr.rel (0) target = $region5
  $region4: #{tile.6} parent=0 // pred_region
    _
  $region5: #{tile.6} parent=0 // pred_fallthru
    _
  %v4 = vld [vmem:[%s0] ss:$0 sm:$0xff]
  %5 = vst [vmem:[%s1] sm:$0x3] %v4

// kernel: tile.7
$region0: #{tile.7}
  %s0 = inlined_call_operand.vmem [shape: f32[2,64], index: 0, kind: input, shape index: {}]
  %s1 = inlined_call_operand.vmem [shape: f32[1,128], index: 1, kind: output, shape index: {}]
  $region1: #{tile.7} parent=0
    #allocation0 [shape = 'u8[4096]{0}', space=vmem, size = 0x1000, scoped, tag = 'scoped mem for output reshape']
    #allocation1 [shape = 'u8[4096]{0}', space=vmem, size = 0x1000, scoped, tag = 'scoped mem for input reshape']
    %s3 = sshllo.u32 0, 2
    %v4 = vld [vmem:[%s0] sm:%s3]
    %5 = vst [vmem:[#allocation1] sm:%s3] %v4
    %v6 = vld [vmem:[#allocation1] sm:$0x1]
    %vm7 = vcmask 523264
    %8 = vst.msk [vmem:[#allocation0] sm:$0x1] %vm7, %v6
    %s9 = scalar_lea.vmem [#allocation1], 1
    %v10 = vld [vmem:[%s9] sm:$0x1]
    %11 = vrot.lane.b32.xlu0 %v10, 64
    %v12 = vpop.permute.xlu0 %11
    %vm13 = vcmask 1048064
    %14 = vst.msk [vmem:[#allocation0] sm:$0x1] %vm13, %v12
    %s16 = sshllo.u32 0, 1
    %v18 = vld [vmem:[#allocation0] sm:%s16]
    %s19 = sshllo.u32 0, 1
    %20 = vst [vmem:[%s1] sm:%s19] %v18

// kernel: resnet34_stem_forward.1
$region0: #{resnet34_stem_forward.1}
  #allocation0 [shape = 'u32[]', space=smem, size = 0x4, offset = 0x4, fixed_abs, tag = 'smem constant byte address 0x4 - core index']
  #allocation1 [shape = 'u32[144,128]{1,0:T(1,128)}', space=vmem, size = 0x12000, scoped, tag = 'internal scratch']
  %s0 = inlined_call_operand.vmem [shape: bf16[64,294], index: 0, kind: input, shape index: {}]
  %s1 = inlined_call_operand.vmem [shape: bf16[294,128], index: 1, kind: input, shape index: {}]
  %s2 = inlined_call_operand.vmem [shape: f32[1,128], index: 2, kind: input, shape index: {}]
  %s3 = inlined_call_operand.vmem [shape: bf16[64,128], index: 3, kind: output, shape index: {}]
  %s4 = sld [smem:[#allocation0]]
  $region45: #{resnet34_stem_forward.1} parent=0
    _
  %s6 = ssub.s32 1, %s4
  %s7 = scalar_select 0, %s6, %s4
  loop: start=0, step=1, limit=6
  $region2: #{resnet34_stem_forward.1} parent=0 // loop_pre_header
    _
  $region3: #{resnet34_stem_forward.1} parent=0 // loop_header
    %s9 = sphi 0, %s13
    %p10 = scmp.ge.s32.totalorder %s9, 6
    %s19 = sphi 0, %s21
    %s22 = sphi 0, %s19
    %s23 = sphi 0, %s22
    %s39 = sphi 0, %s23
    %s43 = sphi 0, %s43
    %s45 = sphi 0, %s43
    %s46 = sphi 0, %s45
    %s60 = sphi 0, %s46
    %s64 = sphi 0, %s64
    %s66 = sphi 0, %s64
    %s67 = sphi 0, %s66
    %s81 = sphi 0, %s67
    %s87 = sphi 0, %s89
    %s90 = sphi 0, %s87
    %s91 = sphi 0, %s90
    %s107 = sphi 0, %s91
  $region4: #{resnet34_stem_forward.1} parent=0 // loop_header_branch
    %12 = sbr.rel (%p10) target = $region8
  $region5: #{resnet34_stem_forward.1} parent=0 // loop_body
    %s14 = ssub.s32 %s9, 1
    %s15 = ssub.s32 %s9, 2
    %s16 = sadd.s32 %s9, 1
    %s17 = ssub.s32 %s9, %s16
    %p18 = scmp.eq.s32.totalorder %s17, 0
    %s20 = sadd.s32 %s19, 1
    %s21 = scalar_select %p18, %s19, %s20
    %p24 = pneg %p18
    %p25 = scmp.eq.s32.totalorder %s9, 3
    %p26 = por %p24, %p25
    %p27 = scmp.ne.s32.totalorder %s19, %s22
    %p28 = scmp.eq.s32.totalorder %s9, 0
    %p29 = por %p27, %p28
    %p30 = scmp.ne.s32.totalorder %s19, %s22
    %p31 = scmp.eq.s32.totalorder %s14, 3
    %p32 = por %p30, %p31
    %p33 = scmp.ne.s32.totalorder %s22, %s23
    %p34 = scmp.eq.s32.totalorder %s14, 0
    %p35 = por %p33, %p34
    %p36 = scmp.ne.s32.totalorder %s22, %s23
    %p37 = scmp.eq.s32.totalorder %s15, 3
    %p38 = por %p36, %p37
    %p40 = scmp.ne.s32.totalorder %s23, %s39
    %p41 = scmp.eq.s32.totalorder %s15, 0
    %p42 = por %p40, %p41
    %s44 = sadd.s32 %s43, 1
    %p47 = scmp.eq.s32.totalorder %s9, 3
    %p48 = scmp.ne.s32.totalorder %s43, %s45
    %p49 = scmp.eq.s32.totalorder %s9, 0
    %p50 = por %p48, %p49
    %p51 = scmp.ne.s32.totalorder %s43, %s45
    %p52 = scmp.eq.s32.totalorder %s14, 3
    %p53 = por %p51, %p52
    %p54 = scmp.ne.s32.totalorder %s45, %s46
    %p55 = scmp.eq.s32.totalorder %s14, 0
    %p56 = por %p54, %p55
    %p57 = scmp.ne.s32.totalorder %s45, %s46
    %p58 = scmp.eq.s32.totalorder %s15, 3
    %p59 = por %p57, %p58
    %p61 = scmp.ne.s32.totalorder %s46, %s60
    %p62 = scmp.eq.s32.totalorder %s15, 0
    %p63 = por %p61, %p62
    %s65 = sadd.s32 %s64, 1
    %p68 = scmp.eq.s32.totalorder %s9, 3
    %p69 = scmp.ne.s32.totalorder %s64, %s66
    %p70 = scmp.eq.s32.totalorder %s9, 0
    %p71 = por %p69, %p70
    %p72 = scmp.ne.s32.totalorder %s64, %s66
    %p73 = scmp.eq.s32.totalorder %s14, 3
    %p74 = por %p72, %p73
    %p75 = scmp.ne.s32.totalorder %s66, %s67
    %p76 = scmp.eq.s32.totalorder %s14, 0
    %p77 = por %p75, %p76
    %p78 = scmp.ne.s32.totalorder %s66, %s67
    %p79 = scmp.eq.s32.totalorder %s15, 3
    %p80 = por %p78, %p79
    %p82 = scmp.ne.s32.totalorder %s67, %s81
    %p83 = scmp.eq.s32.totalorder %s15, 0
    %p84 = por %p82, %p83
    %s85 = ssub.s32 %s9, %s16
    %p86 = scmp.eq.s32.totalorder %s85, 0
    %s88 = sadd.s32 %s87, 1
    %s89 = scalar_select %p86, %s87, %s88
    %p92 = pneg %p86
    %p93 = scmp.eq.s32.totalorder %s9, 3
    %p94 = por %p92, %p93
    %p95 = scmp.ne.s32.totalorder %s87, %s90
    %p96 = scmp.eq.s32.totalorder %s9, 0
    %p97 = por %p95, %p96
    %p98 = scmp.ne.s32.totalorder %s87, %s90
    %p99 = scmp.eq.s32.totalorder %s14, 3
    %p100 = por %p98, %p99
    %p101 = scmp.ne.s32.totalorder %s90, %s91
    %p102 = scmp.eq.s32.totalorder %s14, 0
    %p103 = por %p101, %p102
    %p104 = scmp.ne.s32.totalorder %s90, %s91
    %p105 = scmp.eq.s32.totalorder %s15, 3
    %p106 = por %p104, %p105
    %p108 = scmp.ne.s32.totalorder %s91, %s107
    %p109 = scmp.eq.s32.totalorder %s15, 0
    %p110 = por %p108, %p109
    %p111 = scmp.le.s32.totalorder 1, %s9
    %p112 = scmp.lt.s32.totalorder %s9, 5
    %p113 = pnand %p111, %p112
    %p114 = pneg %p113
    // Predicated region
    $region9: #{resnet34_stem_forward.1} parent=5 // pred_check
      _
    $region10: #{resnet34_stem_forward.1} parent=5 // pred_check_branch
      %116 = sbr.rel (%p113) target = $region12
    $region11: #{resnet34_stem_forward.1} parent=5 // pred_region
      %s117 = ssub.s32 %s9, 1
      // Predicated region
      $region13: #{resnet34_stem_forward.1} parent=11 // pred_check
        %p118 = pneg %p56
      $region14: #{resnet34_stem_forward.1} parent=11 // pred_check_branch
        %120 = sbr.rel (%p118) target = $region16
      $region15: #{resnet34_stem_forward.1} parent=11 // pred_region
        _
      $region16: #{resnet34_stem_forward.1} parent=11 // pred_fallthru
        _
      // Predicated region
      $region17: #{resnet34_stem_forward.1} parent=11 // pred_check
        %p121 = pneg %p77
      $region18: #{resnet34_stem_forward.1} parent=11 // pred_check_branch
        %123 = sbr.rel (%p121) target = $region20
      $region19: #{resnet34_stem_forward.1} parent=11 // pred_region
        _
      $region20: #{resnet34_stem_forward.1} parent=11 // pred_fallthru
        _
    $region12: #{resnet34_stem_forward.1} parent=5 // pred_fallthru
      _
    %p124 = scmp.lt.s32.totalorder %s9, 4
    // Predicated region
    $region21: #{resnet34_stem_forward.1} parent=5 // pred_check
      %p125 = pneg %p124
    $region22: #{resnet34_stem_forward.1} parent=5 // pred_check_branch
      %127 = sbr.rel (%p125) target = $region24
    $region23: #{resnet34_stem_forward.1} parent=5 // pred_region
      // Predicated region
      $region25: #{resnet34_stem_forward.1} parent=23 // pred_check
        %p128 = pneg %p29
      $region26: #{resnet34_stem_forward.1} parent=23 // pred_check_branch
        %130 = sbr.rel (%p128) target = $region28
      $region27: #{resnet34_stem_forward.1} parent=23 // pred_region
        %s131 = smul.u32 2, %s9
        %p132 = scmp.lt.s32.totalorder %s131, 7
        %s133 = scalar_select %p132, %s131, 7
        %s134 = smul.addr %s133, 3
        %s135 = smul.addr %s134, 4
        %s136 = scalar_lea.vmem %s0, %s135
        %s137 = smul.u32 2, %s9
      $region28: #{resnet34_stem_forward.1} parent=23 // pred_fallthru
        _
    $region24: #{resnet34_stem_forward.1} parent=5 // pred_fallthru
      _
    %p138 = scmp.le.s32.totalorder 1, %s9
    %p139 = scmp.lt.s32.totalorder %s9, 5
    %p140 = pnand %p138, %p139
    %p141 = pneg %p140
    // Predicated region
    $region29: #{resnet34_stem_forward.1} parent=5 // pred_check
      _
    $region30: #{resnet34_stem_forward.1} parent=5 // pred_check_branch
      %143 = sbr.rel (%p140) target = $region32
    $region31: #{resnet34_stem_forward.1} parent=5 // pred_region
      %s144 = ssub.s32 %s9, 1
      %s145 = smul.u32 2, %s14
      %p146 = scmp.lt.s32.totalorder %s145, 7
      %s147 = scalar_select %p146, %s145, 7
      %s148 = smul.addr %s147, 3
      %s149 = smul.addr %s148, 4
      %s150 = scalar_lea.vmem %s0, %s149
      %p151 = pneg %p35
      %p152 = pneg %p32
      %p153 = pneg %p56
      %p154 = pneg %p53
      %p155 = pneg %p77
      %p156 = pneg %p74
      %p157 = pneg %p103
      %p158 = pneg %p100
      %s159 = smul.u32 2, %s14
      %p160 = scmp.lt.s32.totalorder %s159, 7
      %s161 = scalar_select %p160, %s159, 7
      %s162 = smul.addr %s161, 4
      %s163 = scalar_lea.vmem %s3, %s162
      %s164 = smul.u32 2, %s14
      %p165 = scmp.lt.s32.totalorder %s164, 7
      %s166 = scalar_select %p165, %s164, 7
      %s167 = smul.addr %s166, 3
      %s168 = smul.addr %s167, 4
      %s169 = scalar_lea.vmem %s0, %s168
      %s170 = smul.u32 2, %s14
      %s171 = smul.u32 2, %s14
      %p172 = scmp.lt.s32.totalorder %s171, 7
      %s173 = scalar_select %p172, %s171, 7
      %s174 = smul.addr %s173, 4
      %s175 = scalar_lea.vmem %s3, %s174
      %s176 = smul.u32 2, %s14
      %v178 = vld [vmem:[%s169] sm:$0xff]
      %v179 = vld [vmem:[%s169 + $0x8] sm:$0xf]
      %v180 = vld [vmem:[%s169 + $0xc] sm:$0xff]
      %v181 = vld [vmem:[%s169 + $0x14] sm:$0xf]
      %v182 = vld [vmem:[%s1] sm:$0xf]
      %v183 = vld [vmem:[%s1 + $0x4] sm:$0xf]
      %v184 = vld [vmem:[%s1 + $0x8] sm:$0xf]
      %v185 = vld [vmem:[%s1 + $0xc] sm:$0xf]
      %v186 = vld [vmem:[%s1 + $0x10] sm:$0xf]
      %v187 = vld [vmem:[%s1 + $0x14] sm:$0xf]
      %v188 = vld [vmem:[%s1 + $0x18] sm:$0xf]
      %v189 = vld [vmem:[%s1 + $0x1c] sm:$0xf]
      %v190 = vld [vmem:[%s1 + $0x20] sm:$0xf]
      %v191 = vld [vmem:[%s1 + $0x24] sm:$0xf]
      %v192 = vld [vmem:[%s1 + $0x28] sm:$0xf]
      %v193 = vld [vmem:[%s1 + $0x2c] sm:$0xf]
      %v194 = vld [vmem:[%s1 + $0x30] sm:$0xf]
      %v195 = vld [vmem:[%s1 + $0x34] sm:$0xf]
      %v196 = vld [vmem:[%s1 + $0x38] sm:$0xf]
      %v197 = vld [vmem:[%s1 + $0x3c] sm:$0xf]
      %v198 = vld [vmem:[%s1 + $0x40] sm:$0xf]
      %v199 = vld [vmem:[%s1 + $0x44] sm:$0xf]
      %v200 = vld [vmem:[%s1 + $0x48] sm:$0xf]
      %v201 = vld [vmem:[%s1 + $0x4c] sm:$0xf]
      %v202 = vld [vmem:[%s1 + $0x50] sm:$0xf]
      %v203 = vld [vmem:[%s1 + $0x54] sm:$0xf]
      %v204 = vld [vmem:[%s1 + $0x58] sm:$0xf]
      %v205 = vld [vmem:[%s1 + $0x5c] sm:$0xf]
      %v206 = vld [vmem:[%s1 + $0x60] sm:$0xf]
      %v207 = vld [vmem:[%s1 + $0x64] sm:$0xf]
      %v208 = vld [vmem:[%s1 + $0x68] sm:$0xf]
      %v209 = vld [vmem:[%s1 + $0x6c] sm:$0xf]
      %v210 = vld [vmem:[%s1 + $0x70] sm:$0xf]
      %v211 = vld [vmem:[%s1 + $0x74] sm:$0xf]
      %v212 = vld [vmem:[%s1 + $0x78] sm:$0xf]
      %v213 = vld [vmem:[%s1 + $0x7c] sm:$0xf]
      %v214 = vld [vmem:[%s1 + $0x80] sm:$0xf]
      %v215 = vld [vmem:[%s1 + $0x84] sm:$0xf]
      %v216 = vld [vmem:[%s1 + $0x88] sm:$0xf]
      %v217 = vld [vmem:[%s1 + $0x8c] sm:$0xf]
      %v218 = vld [vmem:[%s1 + $0x90] sm:$0x7]
      %v219 = vld [vmem:[%s2] sm:$0x1]
      %v221 = vlaneseq
      %v222 = vshrl.u32 %v221, 7
      %v223 = vsub.s32 0, %v222
      %v224 = vrot.slane %v219, %v223
      %v230 = vunpack.c.l.b16 %v178
      %v231 = vunpack.c.h.b16 %v178
      %v232 = vunpack.c.l.b16 %v179
      %v233 = vunpack.c.l.b16 %v180
      %v234 = vunpack.c.h.b16 %v180
      %v235 = vunpack.c.l.b16 %v181
      %v236 = vpack.c.b16 %v233, %v230
      %v237 = vpack.c.b16 %v234, %v231
      %v238 = vpack.c.b16 %v235, %v232
      %v278 = vunpack.c.l.b16 %v182
      %v279 = vunpack.c.l.b16 %v183
      %v280 = vunpack.c.l.b16 %v184
      %v281 = vunpack.c.l.b16 %v185
      %v282 = vunpack.c.l.b16 %v186
      %v283 = vunpack.c.l.b16 %v187
      %v284 = vunpack.c.l.b16 %v188
      %v285 = vunpack.c.l.b16 %v189
      %v286 = vunpack.c.l.b16 %v190
      %v287 = vunpack.c.l.b16 %v191
      %v288 = vunpack.c.l.b16 %v192
      %v289 = vunpack.c.l.b16 %v193
      %v290 = vunpack.c.l.b16 %v194
      %v291 = vunpack.c.l.b16 %v195
      %v292 = vunpack.c.l.b16 %v196
      %v293 = vunpack.c.l.b16 %v197
      %v294 = vunpack.c.l.b16 %v198
      %v295 = vunpack.c.l.b16 %v199
      %v296 = vunpack.c.l.b16 %v200
      %v297 = vunpack.c.l.b16 %v201
      %v298 = vunpack.c.l.b16 %v202
      %v299 = vunpack.c.l.b16 %v203
      %v300 = vunpack.c.l.b16 %v204
      %v301 = vunpack.c.l.b16 %v205
      %v302 = vunpack.c.l.b16 %v206
      %v303 = vunpack.c.l.b16 %v207
      %v304 = vunpack.c.l.b16 %v208
      %v305 = vunpack.c.l.b16 %v209
      %v306 = vunpack.c.l.b16 %v210
      %v307 = vunpack.c.l.b16 %v211
      %v308 = vunpack.c.l.b16 %v212
      %v309 = vunpack.c.l.b16 %v213
      %v310 = vunpack.c.l.b16 %v214
      %v311 = vunpack.c.l.b16 %v215
      %v312 = vunpack.c.l.b16 %v216
      %v313 = vunpack.c.l.b16 %v217
      %v314 = vunpack.c.l.b16 %v218
      %v315 = vpack.c.b16 %v279, %v278
      %v316 = vpack.c.b16 %v281, %v280
      %v317 = vpack.c.b16 %v283, %v282
      %v318 = vpack.c.b16 %v285, %v284
      %v319 = vpack.c.b16 %v287, %v286
      %v320 = vpack.c.b16 %v289, %v288
      %v321 = vpack.c.b16 %v291, %v290
      %v322 = vpack.c.b16 %v293, %v292
      %v323 = vpack.c.b16 %v295, %v294
      %v324 = vpack.c.b16 %v297, %v296
      %v325 = vpack.c.b16 %v299, %v298
      %v326 = vpack.c.b16 %v301, %v300
      %v327 = vpack.c.b16 %v303, %v302
      %v328 = vpack.c.b16 %v305, %v304
      %v329 = vpack.c.b16 %v307, %v306
      %v330 = vpack.c.b16 %v309, %v308
      %v331 = vpack.c.b16 %v311, %v310
      %v332 = vpack.c.b16 %v313, %v312
      %v333 = vpack.c.b16 %v314, %v314
      %vm352 = vcmask 310272
      %v354 = vsel %vm352, %v238, 0
      %vm356 = vcmask 1042432
      %v358 = vsel %vm356, %v333, 0
      %360 = vmatprep.subr.bf16.mxu0 0
      %361 = vmatpush1.bf16.msra.mxu0 %v315
      %362 = vmatprep.subr.bf16.mxu0 0
      %363 = vmatpush1.bf16.msra.mxu0 %v316
      %364 = vmatprep.subr.bf16.mxu0 0
      %365 = vmatpush1.bf16.msra.mxu0 %v317
      %366 = vmatprep.subr.bf16.mxu0 0
      %367 = vmatpush1.bf16.msra.mxu0 %v318
      %368 = vmatprep.subr.bf16.mxu0 0
      %369 = vmatpush1.bf16.msra.mxu0 %v319
      %370 = vmatprep.subr.bf16.mxu0 0
      %371 = vmatpush1.bf16.msra.mxu0 %v320
      %372 = vmatprep.subr.bf16.mxu0 0
      %373 = vmatpush1.bf16.msra.mxu0 %v321
      %374 = vmatprep.subr.bf16.mxu0 0
      %375 = vmatpush1.bf16.msra.mxu0 %v322
      %376 = vmatprep.subr.bf16.mxu0 0
      %377 = vmatpush1.bf16.msra.mxu0 %v323
      %378 = vmatprep.subr.bf16.mxu0 0
      %379 = vmatpush1.bf16.msra.mxu0 %v324
      %380 = vmatprep.subr.bf16.mxu0 0
      %381 = vmatpush1.bf16.msra.mxu0 %v325
      %382 = vmatprep.subr.bf16.mxu0 0
      %383 = vmatpush1.bf16.msra.mxu0 %v326
      %384 = vmatprep.subr.bf16.mxu0 0
      %385 = vmatpush1.bf16.msra.mxu0 %v327
      %386 = vmatprep.subr.bf16.mxu0 0
      %387 = vmatpush1.bf16.msra.mxu0 %v328
      %388 = vmatprep.subr.bf16.mxu0 0
      %389 = vmatpush1.bf16.msra.mxu0 %v329
      %390 = vmatprep.subr.bf16.mxu0 0
      %391 = vmatpush1.bf16.msra.mxu0 %v330
      %392 = vmatprep.mubr.bf16.mxu0 %v237
      %393 = vmatmul.mubr.bf16.gmra.mrb[0].mxu0 %v236
      %v394 = vpop.f32.mrb[0].mxu0
      %v395 = vadd.f32 %v224, %v394
      %v396 = vpop.f32.mrb[0].mxu0
      %v397 = vpop.f32.mrb[0].mxu0
      %v398 = vadd.f32 %v224, %v397
      %v399 = vpop.f32.mrb[0].mxu0
      %400 = vdwg.mxu0
      %401 = vmatprep.subr.bf16.mxu0 0
      %402 = vmatpush1.bf16.msra.mxu0 %v331
      %403 = vmatprep.subr.bf16.mxu0 0
      %404 = vmatpush1.bf16.msra.mxu0 %v332
      %405 = vmatprep.subr.bf16.mxu0 0
      %406 = vmatpush1.bf16.msra.mxu0 %v358
      %407 = vmatprep.subr.bf16.mxu0 0
      %408 = vmatpush1.bf16.msra.mxu0 0
      %409 = vmatprep.subr.bf16.mxu0 0
      %410 = vmatpush1.bf16.msra.mxu0 0
      %411 = vmatprep.subr.bf16.mxu0 0
      %412 = vmatpush1.bf16.msra.mxu0 0
      %413 = vmatprep.subr.bf16.mxu0 0
      %414 = vmatpush1.bf16.msra.mxu0 0
      %415 = vmatprep.subr.bf16.mxu0 0
      %416 = vmatpush1.bf16.msra.mxu0 0
      %417 = vmatprep.subr.bf16.mxu0 0
      %418 = vmatpush1.bf16.msra.mxu0 0
      %419 = vmatprep.subr.bf16.mxu0 0
      %420 = vmatpush1.bf16.msra.mxu0 0
      %421 = vmatprep.subr.bf16.mxu0 0
      %422 = vmatpush1.bf16.msra.mxu0 0
      %423 = vmatprep.subr.bf16.mxu0 0
      %424 = vmatpush1.bf16.msra.mxu0 0
      %425 = vmatprep.subr.bf16.mxu0 0
      %426 = vmatpush1.bf16.msra.mxu0 0
      %427 = vmatprep.subr.bf16.mxu0 0
      %428 = vmatpush1.bf16.msra.mxu0 0
      %429 = vmatprep.subr.bf16.mxu0 0
      %430 = vmatpush1.bf16.msra.mxu0 0
      %431 = vmatprep.subr.bf16.mxu0 0
      %432 = vmatpush1.bf16.msra.mxu0 0
      %433 = vmatprep.mubr.bf16.mxu0 0
      %434 = vmatmul.mubr.bf16.gmra.mrb[0].mxu0 %v354
      %v435 = vpop.f32.mrb[0].mxu0
      %v436 = vadd.f32 %v395, %v435
      %v437 = vpop.f32.mrb[0].mxu0
      %v438 = vpop.f32.mrb[0].mxu0
      %v439 = vadd.f32 %v398, %v438
      %v440 = vpop.f32.mrb[0].mxu0
      %441 = vdwg.mxu0
      %v442 = vmax.f32 %v436, 0.0
      %v443 = vmax.f32 %v439, 0.0
      %v444 = vpack.c.bf16 %v443, %v442
      %v446 = vunpack.c.l.b16 %v444
      %v447 = vunpack.c.h.b16 %v444
      %v448 = vpack.c.b16 %v446, %v446
      %v449 = vpack.c.b16 %v447, %v447
      %452 = vst [vmem:[%s175] sm:$0xf] %v448
      %453 = vst [vmem:[%s175 + $0x4] sm:$0xf] %v449
      %s454 = smul.u32 2, %s14
      %p455 = scmp.lt.s32.totalorder %s454, 7
      %s456 = scalar_select %p455, %s454, 7
      %s457 = smul.addr %s456, 4
      %s458 = scalar_lea.vmem %s3, %s457
      // Predicated region
      $region33: #{resnet34_stem_forward.1} parent=31 // pred_check
        %p459 = pneg %p100
      $region34: #{resnet34_stem_forward.1} parent=31 // pred_check_branch
        %461 = sbr.rel (%p459) target = $region36
      $region35: #{resnet34_stem_forward.1} parent=31 // pred_region
        %s462 = smul.u32 2, %s14
      $region36: #{resnet34_stem_forward.1} parent=31 // pred_fallthru
        _
    $region32: #{resnet34_stem_forward.1} parent=5 // pred_fallthru
      _
    %p463 = scmp.le.s32.totalorder 2, %s9
    // Predicated region
    $region37: #{resnet34_stem_forward.1} parent=5 // pred_check
      %p464 = pneg %p463
    $region38: #{resnet34_stem_forward.1} parent=5 // pred_check_branch
      %466 = sbr.rel (%p464) target = $region40
    $region39: #{resnet34_stem_forward.1} parent=5 // pred_region
      %s467 = ssub.s32 %s9, 2
      // Predicated region
      $region41: #{resnet34_stem_forward.1} parent=39 // pred_check
        %p468 = pneg %p106
      $region42: #{resnet34_stem_forward.1} parent=39 // pred_check_branch
        %470 = sbr.rel (%p468) target = $region44
      $region43: #{resnet34_stem_forward.1} parent=39 // pred_region
        %s471 = smul.u32 2, %s15
        %p472 = scmp.lt.s32.totalorder %s471, 7
        %s473 = scalar_select %p472, %s471, 7
        %s474 = smul.addr %s473, 4
        %s475 = scalar_lea.vmem %s3, %s474
      $region44: #{resnet34_stem_forward.1} parent=39 // pred_fallthru
        _
    $region40: #{resnet34_stem_forward.1} parent=5 // pred_fallthru
      _
  $region6: #{resnet34_stem_forward.1} parent=0 // loop_footer
    %s13 = sadd.s32 1, %s9
  $region7: #{resnet34_stem_forward.1} parent=0 // loop_footer_branch
    %8 = sbr.rel target = $region3
  $region8: #{resnet34_stem_forward.1} parent=0 // loop_exit
    _

</llo_original>
